<compile_context>
chip_gen: v6e
topology: v6e:2x2x1
jax: 0.10.0
libtpu: 0.0.40
codegen_flags: <defaults>
</compile_context>

<pallas_src>
import functools

import jax
import jax.numpy as jnp
from jax.experimental import pallas as pl
from jax.experimental.pallas import tpu as pltpu

LN_EPS = 1e-5                      # PyTorch nn.LayerNorm default eps
HIGH = jax.lax.Precision.HIGHEST   # used only for the one-time weight folding


# ----------------------------- Pallas kernel ------------------------------

def _phznet_fused_kernel(x_ref, g_ref, b_ref, w_ref, bias_ref, o_ref):
    # LayerNorm (biased variance, matches PyTorch)
    x = x_ref[...]
    mu = jnp.mean(x, axis=-1, keepdims=True)
    xc = x - mu
    var = jnp.mean(xc * xc, axis=-1, keepdims=True)
    xn = xc * jax.lax.rsqrt(var + LN_EPS) * g_ref[...] + b_ref[...]
    # Entire post-LayerNorm network folded into one MXU matmul + bias
    z = jnp.dot(xn, w_ref[...], preferred_element_type=jnp.float32) + bias_ref[...]
    # Sigmoid head of PHZNet
    o_ref[...] = (1.0 / (1.0 + jnp.exp(-z))).astype(o_ref.dtype)


@functools.partial(jax.jit, static_argnames=("n_out",))
def phznet_forward(x, gamma, beta, w_eff, b_eff, *, n_out):
    """x: (B, F) f32.  w_eff: (F, n_pad) f32, b_eff: (n_pad,) f32 (lane-padded)."""
    B, F = x.shape
    n_pad = w_eff.shape[1]
    out_padded = pl.pallas_call(
        _phznet_fused_kernel,
        out_shape=jax.ShapeDtypeStruct((B, n_pad), x.dtype),
        in_specs=[pl.BlockSpec(memory_space=pltpu.MemorySpace.VMEM)] * 5,
        out_specs=pl.BlockSpec(memory_space=pltpu.MemorySpace.VMEM),
    )(
        x,
        gamma.reshape(1, F),
        beta.reshape(1, F),
        w_eff,
        b_eff.reshape(1, n_pad),
    )
    return out_padded[:, :n_out]


# ------------------------- parameter init & folding -----------------------

def find_max_factors(n):
    factors = [i for i in range(1, min(n + 1, 21)) if n % i == 0]
    factors.sort(reverse=True)
    return factors[:3] if len(factors) >= 3 else factors


def _linear_init(key, fan_in, fan_out):
    # Mirrors nn.Linear default init: U(-1/sqrt(fan_in), 1/sqrt(fan_in))
    kw, kb = jax.random.split(key)
    bound = 1.0 / (fan_in ** 0.5)
    w = jax.random.uniform(kw, (fan_out, fan_in), jnp.float32, -bound, bound)
    b = jax.random.uniform(kb, (fan_out,), jnp.float32, -bound, bound)
    return w, b


def init_raw_params(key, in_features, out_features):
    """Raw parameters mirroring hybrid_zipped_network (unused linear_2 omitted)."""
    seg_lengths = find_max_factors(in_features)
    keys = jax.random.split(key, 1 + 3 * len(seg_lengths))
    raw = {
        "gamma": jnp.ones((in_features,), jnp.float32),
        "beta": jnp.zeros((in_features,), jnp.float32),
    }
    raw["W1"], raw["b1"] = _linear_init(keys[0], in_features, out_features)
    blocks = []
    for i, sl in enumerate(seg_lengths):
        k_e, k_d, k_l = keys[1 + 3 * i: 4 + 3 * i]
        We, be = _linear_init(k_e, sl, sl)
        Wd, bd = _linear_init(k_d, sl, sl)
        Wl, bl = _linear_init(k_l, in_features, out_features)
        blocks.append({"We": We, "be": be, "Wd": Wd, "bd": bd, "W": Wl, "b": bl})
    return raw, blocks, seg_lengths


def _round_up(n, m):
    return ((n + m - 1) // m) * m


def fold_params(raw, blocks, seg_lengths, in_features, out_features, lane=128):
    """Fold everything after LayerNorm into one (F, N_pad) weight + (N_pad,) bias."""
    F, N = in_features, out_features
    eye_f = jnp.eye(F, dtype=jnp.float32)
    zero_f = jnp.zeros((1, F), jnp.float32)

    W_eff = raw["W1"].T        # (F, N)
    b_eff = raw["b1"]          # (N,)

    for sl, hb in zip(seg_lengths, blocks):
        G = F // sl

        def seg_map(v, hb=hb, G=G, sl=sl):                      # row-wise affine
            M = v.shape[0]
            y = jnp.dot(v.reshape(M * G, sl), hb["We"].T, precision=HIGH) + hb["be"]
            return y.reshape(M, F)

        def permseg_map(v, hb=hb, G=G, sl=sl):                  # row-wise affine
            M = v.shape[0]
            vp = v.reshape(M, G, sl).transpose(0, 2, 1).reshape(M * G, sl)
            y = jnp.dot(vp, hb["Wd"].T, precision=HIGH) + hb["bd"]
            return y.reshape(M, sl, G).transpose(0, 2, 1).reshape(M, F)

        c_seg = seg_map(zero_f)                 # bias part of seg path, (1, F)
        A_seg = seg_map(eye_f) - c_seg          # linear part, (F, F)
        c_pp = permseg_map(zero_f)
        A_pp = permseg_map(eye_f) - c_pp

        # hb(x) = (x + seg(x) + permseg(x)) @ Wb^T + 3*bb
        M_in = eye_f + A_seg + A_pp             # (F, F)
        W_eff = W_eff + jnp.dot(M_in, hb["W"].T, precision=HIGH)
        b_eff = b_eff + jnp.dot(c_seg + c_pp, hb["W"].T, precision=HIGH)[0] + 3.0 * hb["b"]

    # Zero-pad the output dim to a lane multiple -> unmasked stores in the kernel.
    n_pad = _round_up(max(N, 1), lane)
    W_pad = jnp.zeros((F, n_pad), jnp.float32).at[:, :N].set(W_eff)
    b_pad = jnp.zeros((n_pad,), jnp.float32).at[:N].set(b_eff)
    return W_pad, b_pad


# --------------------- unfused pure-JAX reference (checker) ----------------

def reference_forward(x, raw, blocks, seg_lengths, in_features):
    F = in_features
    B = x.shape[0]
    mu = x.mean(-1, keepdims=True)
    xc = x - mu
    var = (xc * xc).mean(-1, keepdims=True)
    xn = xc / jnp.sqrt(var + LN_EPS) * raw["gamma"] + raw["beta"]
    out = xn @ raw["W1"].T + raw["b1"]
    for sl, hb in zip(seg_lengths, blocks):
        G = F // sl
        xe = (xn.reshape(B * G, sl) @ hb["We"].T + hb["be"]).reshape(B, F)
        xd = xn.reshape(B, G, sl).transpose(0, 2, 1).reshape(B * G, sl)
        xd = xd @ hb["Wd"].T + hb["bd"]
        xd = xd.reshape(B, sl, G).transpose(0, 2, 1).reshape(B, F)
        out = out + (xn @ hb["W"].T + hb["b"])
        out = out + (xe @ hb["W"].T + hb["b"])
        out = out + (xd @ hb["W"].T + hb["b"])
    return jax.nn.sigmoid(out)


# ----------------------------------- main ----------------------------------

if __name__ == "__main__":
    IN_FEATURES = 160   # factors <= 20 -> seg_lengths = [20, 16, 10]
    OUT_FEATURES = 2    # PHZNet hard-codes hybrid_zipped_network(in_features, 2)
    BATCH = 8           # full sublane utilization (vreg = 8 x 128)

    key = jax.random.PRNGKey(0)
    k_x, k_p = jax.random.split(key)
    x = jax.random.normal(k_x, (BATCH, IN_FEATURES), jnp.float32)

    raw, blocks, seg_lengths = init_raw_params(k_p, IN_FEATURES, OUT_FEATURES)
    w_eff, b_eff = fold_params(raw, blocks, seg_lengths, IN_FEATURES, OUT_FEATURES)

    out = phznet_forward(x, raw["gamma"], raw["beta"], w_eff, b_eff,
                         n_out=OUT_FEATURES)
    out = jax.block_until_ready(out)
    assert out.shape == (BATCH, OUT_FEATURES) and out.dtype == jnp.float32

    # Correctness vs. an unfused pure-JAX port of the PyTorch forward (reassociation-
    # level differences only).
    ref = jax.block_until_ready(
        reference_forward(x, raw, blocks, seg_lengths, IN_FEATURES))
    max_err = float(jnp.max(jnp.abs(out - ref)))
    assert max_err < 2e-3, f"mismatch vs reference: max |diff| = {max_err}"

    print("KERNEL_OK")
</pallas_src>

<mosaic_0001>
module attributes {stable_mosaic.version = 11 : i64} {
  func.func @_phznet_fused_kernel(%arg0: memref<8x160xf32, #tpu.memory_space<vmem>>, %arg1: memref<1x160xf32, #tpu.memory_space<vmem>>, %arg2: memref<1x160xf32, #tpu.memory_space<vmem>>, %arg3: memref<160x128xf32, #tpu.memory_space<vmem>>, %arg4: memref<1x128xf32, #tpu.memory_space<vmem>>, %arg5: memref<8x128xf32, #tpu.memory_space<vmem>>) attributes {dimension_semantics = [], scalar_prefetch = 0 : i64, scratch_operands = 0 : i64, tpu.core_type = #tpu.core_type<tc>} {
    %c0 = arith.constant 0 : index
    %c0_0 = arith.constant 0 : index
    %0 = vector.load %arg0[%c0, %c0_0] : memref<8x160xf32, #tpu.memory_space<vmem>>, vector<8x160xf32>
    %cst = arith.constant dense<0.000000e+00> : vector<8xf32>
    %1 = vector.multi_reduction <add>, %0, %cst [1] : vector<8x160xf32> to vector<8xf32>
    %2 = vector.shape_cast %1 : vector<8xf32> to vector<8x1xf32>
    %cst_1 = arith.constant 1.600000e+02 : f32
    %3 = vector.broadcast %cst_1 : f32 to vector<8x1xf32>
    %4 = arith.divf %2, %3 : vector<8x1xf32>
    %5 = vector.broadcast %4 : vector<8x1xf32> to vector<8x160xf32>
    %6 = arith.subf %0, %5 : vector<8x160xf32>
    %7 = arith.mulf %6, %6 : vector<8x160xf32>
    %cst_2 = arith.constant dense<0.000000e+00> : vector<8xf32>
    %8 = vector.multi_reduction <add>, %7, %cst_2 [1] : vector<8x160xf32> to vector<8xf32>
    %9 = vector.shape_cast %8 : vector<8xf32> to vector<8x1xf32>
    %cst_3 = arith.constant 1.600000e+02 : f32
    %10 = vector.broadcast %cst_3 : f32 to vector<8x1xf32>
    %11 = arith.divf %9, %10 : vector<8x1xf32>
    %cst_4 = arith.constant 9.99999974E-6 : f32
    %12 = vector.broadcast %cst_4 : f32 to vector<8x1xf32>
    %13 = arith.addf %11, %12 : vector<8x1xf32>
    %14 = math.rsqrt %13 : vector<8x1xf32>
    %15 = vector.broadcast %14 : vector<8x1xf32> to vector<8x160xf32>
    %16 = arith.mulf %6, %15 : vector<8x160xf32>
    %c0_5 = arith.constant 0 : index
    %c0_6 = arith.constant 0 : index
    %17 = vector.load %arg1[%c0_5, %c0_6] : memref<1x160xf32, #tpu.memory_space<vmem>>, vector<1x160xf32>
    %18 = vector.broadcast %17 : vector<1x160xf32> to vector<8x160xf32>
    %19 = arith.mulf %16, %18 : vector<8x160xf32>
    %c0_7 = arith.constant 0 : index
    %c0_8 = arith.constant 0 : index
    %20 = vector.load %arg2[%c0_7, %c0_8] : memref<1x160xf32, #tpu.memory_space<vmem>>, vector<1x160xf32>
    %21 = vector.broadcast %20 : vector<1x160xf32> to vector<8x160xf32>
    %22 = arith.addf %19, %21 : vector<8x160xf32>
    %c0_9 = arith.constant 0 : index
    %c0_10 = arith.constant 0 : index
    %23 = vector.load %arg3[%c0_9, %c0_10] : memref<160x128xf32, #tpu.memory_space<vmem>>, vector<160x128xf32>
    %cst_11 = arith.constant dense<0.000000e+00> : vector<8x128xf32>
    %24 = tpu.matmul %22, %23, %cst_11 {dimension_numbers = #tpu.dot_dimension_numbers<[1], [0], [0], [1], [0, 0, 1, 1], [], []>} : vector<8x160xf32>, vector<160x128xf32>, vector<8x128xf32> -> vector<8x128xf32>
    %c0_12 = arith.constant 0 : index
    %c0_13 = arith.constant 0 : index
    %25 = vector.load %arg4[%c0_12, %c0_13] : memref<1x128xf32, #tpu.memory_space<vmem>>, vector<1x128xf32>
    %26 = vector.broadcast %25 : vector<1x128xf32> to vector<8x128xf32>
    %27 = arith.addf %24, %26 : vector<8x128xf32>
    %cst_14 = arith.constant 0.000000e+00 : f32
    %28 = vector.broadcast %cst_14 : f32 to vector<8x128xf32>
    %29 = arith.subf %28, %27 : vector<8x128xf32>
    %30 = math.exp %29 : vector<8x128xf32>
    %cst_15 = arith.constant 1.000000e+00 : f32
    %31 = vector.broadcast %cst_15 : f32 to vector<8x128xf32>
    %32 = arith.addf %31, %30 : vector<8x128xf32>
    %cst_16 = arith.constant 1.000000e+00 : f32
    %33 = vector.broadcast %cst_16 : f32 to vector<8x128xf32>
    %34 = arith.divf %33, %32 : vector<8x128xf32>
    %c0_17 = arith.constant 0 : index
    %c0_18 = arith.constant 0 : index
    %35 = vector.load %arg5[%c0_17, %c0_18] : memref<8x128xf32, #tpu.memory_space<vmem>>, vector<8x128xf32>
    tpu.vector_store %arg5[%c0_17, %c0_18], %34 {strides = array<i32>} : memref<8x128xf32, #tpu.memory_space<vmem>>, vector<8x128xf32>,
    return
  }
}

</mosaic_0001>

<llo_original>
// kernel: phznet_forward.1
$region0: #{phznet_forward.1}
  #allocation0 [shape = 'u32[]', space=smem, size = 0x4, offset = 0x4, fixed_abs, tag = 'smem constant byte address 0x4 - core index']
  #allocation1 [shape = 'u32[144,128]{1,0:T(1,128)}', space=vmem, size = 0x12000, scoped, tag = 'internal scratch']
  %s0 = inlined_call_operand.hbm [shape: f32[8,160], index: 0, kind: input, shape index: {}]
  %s1 = inlined_call_operand.vmem [shape: f32[1,160], index: 1, kind: input, shape index: {}]
  %s2 = inlined_call_operand.vmem [shape: f32[1,160], index: 2, kind: input, shape index: {}]
  %s3 = inlined_call_operand.hbm [shape: f32[160,128], index: 3, kind: input, shape index: {}]
  %s4 = inlined_call_operand.vmem [shape: f32[1,128], index: 4, kind: input, shape index: {}]
  %s5 = inlined_call_operand.vmem [shape: f32[8,128], index: 5, kind: output, shape index: {}]
  %s6 = sld [smem:[#allocation0]]
  $region38: #{phznet_forward.1} parent=0
    _
  %s8 = ssub.s32 1, %s6
  %s9 = scalar_select 0, %s8, %s6
  $region1: #{phznet_forward.1} parent=0
    #allocation2 [shape = 'u8[8192]{0}', space=vmem, size = 0x2000, scoped, tag = 'input window, operand 0, single buffered']
    #allocation3 [shape = 's32[1]{0}', space=sflag, size = 0x4, scoped, tag = 'scoped memory for phznet_forward.1']
    #allocation4 [shape = 'u8[81920]{0}', space=vmem, size = 0x14000, scoped, tag = 'input window, operand 3, single buffered']
    #allocation5 [shape = 's32[1]{0}', space=sflag, size = 0x4, scoped, tag = 'scoped memory for phznet_forward.1']
    %10 = vsyncpa [#allocation3], 0
    %11 = vsyncpa [#allocation5], 0
    // Predicated region
    $region2: #{phznet_forward.1} parent=1 // pred_check
      _
    $region3: #{phznet_forward.1} parent=1 // pred_check_branch
      %13 = sbr.rel (0) target = $region5
    $region4: #{phznet_forward.1} parent=1 // pred_region
      %s15 = ssub.s32 256, 256
      %16 = vsyncadd [#allocation3], %s15
      %s18 = sshll.u32 [#allocation2], 4
      %s19 = int_to_ptr.vmem [resolvable:$true] %s18
      %21 = dma.hbm_to_vmem [thread:$0]  %s0, 256, %s19, [#allocation3]
    $region5: #{phznet_forward.1} parent=1 // pred_fallthru
      _
    // Predicated region
    $region6: #{phznet_forward.1} parent=1 // pred_check
      _
    $region7: #{phznet_forward.1} parent=1 // pred_check_branch
      %23 = sbr.rel (0) target = $region9
    $region8: #{phznet_forward.1} parent=1 // pred_region
      _
    $region9: #{phznet_forward.1} parent=1 // pred_fallthru
      _
    // Predicated region
    $region10: #{phznet_forward.1} parent=1 // pred_check
      _
    $region11: #{phznet_forward.1} parent=1 // pred_check_branch
      %25 = sbr.rel (0) target = $region13
    $region12: #{phznet_forward.1} parent=1 // pred_region
      _
    $region13: #{phznet_forward.1} parent=1 // pred_fallthru
      _
    // Predicated region
    $region14: #{phznet_forward.1} parent=1 // pred_check
      _
    $region15: #{phznet_forward.1} parent=1 // pred_check_branch
      %27 = sbr.rel (0) target = $region17
    $region16: #{phznet_forward.1} parent=1 // pred_region
      %s29 = ssub.s32 2560, 2560
      %30 = vsyncadd [#allocation5], %s29
      %s31 = sshll.u32 [#allocation4], 4
      %s32 = int_to_ptr.vmem [resolvable:$true] %s31
      %37 = dma.hbm_to_vmem [thread:$0]  %s3, 2560, %s32, [#allocation5], 128, 128, 8
    $region17: #{phznet_forward.1} parent=1 // pred_fallthru
      _
    // Predicated region
    $region18: #{phznet_forward.1} parent=1 // pred_check
      _
    $region19: #{phznet_forward.1} parent=1 // pred_check_branch
      %39 = sbr.rel (0) target = $region21
    $region20: #{phznet_forward.1} parent=1 // pred_region
      _
    $region21: #{phznet_forward.1} parent=1 // pred_fallthru
      _
    // Predicated region
    $region22: #{phznet_forward.1} parent=1 // pred_check
      _
    $region23: #{phznet_forward.1} parent=1 // pred_check_branch
      %41 = sbr.rel (0) target = $region25
    $region24: #{phznet_forward.1} parent=1 // pred_region
      %42 = dma.done [#allocation3], 256
    $region25: #{phznet_forward.1} parent=1 // pred_fallthru
      _
    // Predicated region
    $region26: #{phznet_forward.1} parent=1 // pred_check
      _
    $region27: #{phznet_forward.1} parent=1 // pred_check_branch
      %44 = sbr.rel (0) target = $region29
    $region28: #{phznet_forward.1} parent=1 // pred_region
      %45 = dma.done [#allocation5], 2560
    $region29: #{phznet_forward.1} parent=1 // pred_fallthru
      _
    %v46 = vld [vmem:[#allocation2] sm:$0xff]
    %v47 = vld [vmem:[#allocation2 + $0x8] sm:$0xff]
    %vm48 = vcmask 261120
    %v49 = vsel %vm48, %v47, 0.0
    %v50 = vadd.f32 %v46, %v49
    %51 = vadd.xlane.f32.xlu0 %v50
    %v52 = vpop.xlane.xlu0 %51
    %v53 = vrcp.pop 160.0
    %v54 = vmul.f32 %v52, %v53
    %v55 = vsub.f32 %v46, %v54
    %v56 = vsub.f32 %v47, %v54
    %v57 = vmul.f32 %v55, %v55
    %v58 = vmul.f32 %v56, %v56
    %v59 = vsel %vm48, %v58, 0.0
    %v60 = vadd.f32 %v57, %v59
    %61 = vadd.xlane.f32.xlu0 %v60
    %v62 = vpop.xlane.xlu0 %61
    %v63 = vmul.f32 %v62, %v53
    %v64 = vadd.f32 %v63, 1e-05
    %v65 = vrsqrt.pop %v64
    %v66 = vmul.f32 %v55, %v65
    %v67 = vmul.f32 %v56, %v65
    %v68 = vld [vmem:[%s1] sm:$0x3]
    %v70 = vlaneseq
    %v71 = vshrl.u32 %v70, 7
    %v72 = vsub.s32 0, %v71
    %v73 = vrot.slane %v68, %v72
    %v74 = vlaneseq
    %v75 = vshrl.u32 %v74, 7
    %v76 = vsub.s32 1, %v75
    %v77 = vrot.slane %v68, %v76
    %v80 = vmul.f32 %v66, %v73
    %v81 = vmul.f32 %v67, %v77
    %v82 = vld [vmem:[%s2] sm:$0x3]
    %v84 = vlaneseq
    %v85 = vshrl.u32 %v84, 7
    %v86 = vsub.s32 0, %v85
    %v87 = vrot.slane %v82, %v86
    %v88 = vlaneseq
    %v89 = vshrl.u32 %v88, 7
    %v90 = vsub.s32 1, %v89
    %v91 = vrot.slane %v82, %v90
    %v94 = vadd.f32 %v80, %v87
    %v95 = vadd.f32 %v81, %v91
    %v96 = vld [vmem:[#allocation4] sm:$0xff]
    %v97 = vld [vmem:[#allocation4 + $0x8] sm:$0xff]
    %v98 = vld [vmem:[#allocation4 + $0x10] sm:$0xff]
    %v99 = vld [vmem:[#allocation4 + $0x18] sm:$0xff]
    %v100 = vld [vmem:[#allocation4 + $0x20] sm:$0xff]
    %v101 = vld [vmem:[#allocation4 + $0x28] sm:$0xff]
    %v102 = vld [vmem:[#allocation4 + $0x30] sm:$0xff]
    %v103 = vld [vmem:[#allocation4 + $0x38] sm:$0xff]
    %v104 = vld [vmem:[#allocation4 + $0x40] sm:$0xff]
    %v105 = vld [vmem:[#allocation4 + $0x48] sm:$0xff]
    %v106 = vld [vmem:[#allocation4 + $0x50] sm:$0xff]
    %v107 = vld [vmem:[#allocation4 + $0x58] sm:$0xff]
    %v108 = vld [vmem:[#allocation4 + $0x60] sm:$0xff]
    %v109 = vld [vmem:[#allocation4 + $0x68] sm:$0xff]
    %v110 = vld [vmem:[#allocation4 + $0x70] sm:$0xff]
    %v111 = vld [vmem:[#allocation4 + $0x78] sm:$0xff]
    %v112 = vld [vmem:[#allocation4 + $0x80] sm:$0xff]
    %v113 = vld [vmem:[#allocation4 + $0x88] sm:$0xff]
    %v114 = vld [vmem:[#allocation4 + $0x90] sm:$0xff]
    %v115 = vld [vmem:[#allocation4 + $0x98] sm:$0xff]
    %v116 = vld [vmem:[%s4] sm:$0x1]
    %v118 = vlaneseq
    %v119 = vshrl.u32 %v118, 7
    %v120 = vsub.s32 0, %v119
    %v121 = vrot.slane %v116, %v120
    %v124 = vsel %vm48, %v95, 0
    %126 = vmatprep.subr.mxu0 0.0
    %127 = vmatpush1.msra.mxu0 %v111
    %128 = vmatprep.subr.mxu0 0.0
    %129 = vmatpush1.msra.mxu0 %v110
    %130 = vmatprep.subr.mxu0 0.0
    %131 = vmatpush1.msra.mxu0 %v109
    %132 = vmatprep.subr.mxu0 0.0
    %133 = vmatpush1.msra.mxu0 %v108
    %134 = vmatprep.subr.mxu0 0.0
    %135 = vmatpush1.msra.mxu0 %v107
    %136 = vmatprep.subr.mxu0 0.0
    %137 = vmatpush1.msra.mxu0 %v106
    %138 = vmatprep.subr.mxu0 0.0
    %139 = vmatpush1.msra.mxu0 %v105
    %140 = vmatprep.subr.mxu0 0.0
    %141 = vmatpush1.msra.mxu0 %v104
    %142 = vmatprep.subr.mxu0 0.0
    %143 = vmatpush1.msra.mxu0 %v103
    %144 = vmatprep.subr.mxu0 0.0
    %145 = vmatpush1.msra.mxu0 %v102
    %146 = vmatprep.subr.mxu0 0.0
    %147 = vmatpush1.msra.mxu0 %v101
    %148 = vmatprep.subr.mxu0 0.0
    %149 = vmatpush1.msra.mxu0 %v100
    %150 = vmatprep.subr.mxu0 0.0
    %151 = vmatpush1.msra.mxu0 %v99
    %152 = vmatprep.subr.mxu0 0.0
    %153 = vmatpush1.msra.mxu0 %v98
    %154 = vmatprep.subr.mxu0 0.0
    %155 = vmatpush1.msra.mxu0 %v97
    %156 = vmatprep.subr.mxu0 0.0
    %157 = vmatpush1.msra.mxu0 %v96
    %158 = vmatprep.subr.mxu0 0.0
    %159 = vmatpush2.msra.mxu0 0.0
    %160 = vmatprep.subr.mxu0 0.0
    %161 = vmatpush2.msra.mxu0 0.0
    %162 = vmatprep.subr.mxu0 0.0
    %163 = vmatpush2.msra.mxu0 0.0
    %164 = vmatprep.subr.mxu0 0.0
    %165 = vmatpush2.msra.mxu0 0.0
    %166 = vmatprep.subr.mxu0 0.0
    %167 = vmatpush2.msra.mxu0 0.0
    %168 = vmatprep.subr.mxu0 0.0
    %169 = vmatpush2.msra.mxu0 0.0
    %170 = vmatprep.subr.mxu0 0.0
    %171 = vmatpush2.msra.mxu0 0.0
    %172 = vmatprep.subr.mxu0 0.0
    %173 = vmatpush2.msra.mxu0 0.0
    %174 = vmatprep.subr.mxu0 0.0
    %175 = vmatpush2.msra.mxu0 0.0
    %176 = vmatprep.subr.mxu0 0.0
    %177 = vmatpush2.msra.mxu0 0.0
    %178 = vmatprep.subr.mxu0 0.0
    %179 = vmatpush2.msra.mxu0 0.0
    %180 = vmatprep.subr.mxu0 0.0
    %181 = vmatpush2.msra.mxu0 0.0
    %182 = vmatprep.subr.mxu0 0.0
    %183 = vmatpush2.msra.mxu0 %v115
    %184 = vmatprep.subr.mxu0 0.0
    %185 = vmatpush2.msra.mxu0 %v114
    %186 = vmatprep.subr.mxu0 0.0
    %187 = vmatpush2.msra.mxu0 %v113
    %188 = vmatprep.subr.mxu0 0.0
    %189 = vmatpush2.msra.mxu0 %v112
    %190 = vmatprep.mubr.f32.mxu0 %v124
    %191 = vmatmul.mubr.f32.gmra.mxu0 %v94
    %v192 = vpop.f32.mrf.mxu0
    %v193 = vadd.f32 %v121, %v192
    %v194 = vpop.f32.mrf.mxu0
    %195 = vdwg.mxu0
    %v196 = vsub.f32 0.0, %v193
    %v197 = vmul.f32 %v196, 1.442695
    %v198 = vpow.pop %v197
    %v199 = vadd.f32 %v198, 1.0
    %v200 = vrcp.pop %v199
    %v201 = vmul.f32 1.0, %v200
    %202 = vst [vmem:[%s5] sm:$0xff] %v201
    // Predicated region
    $region30: #{phznet_forward.1} parent=1 // pred_check
      _
    $region31: #{phznet_forward.1} parent=1 // pred_check_branch
      %204 = sbr.rel (0) target = $region33
    $region32: #{phznet_forward.1} parent=1 // pred_region
      _
    $region33: #{phznet_forward.1} parent=1 // pred_fallthru
      _
    // Predicated region
    $region34: #{phznet_forward.1} parent=1 // pred_check
      _
    $region35: #{phznet_forward.1} parent=1 // pred_check_branch
      %206 = sbr.rel (0) target = $region37
    $region36: #{phznet_forward.1} parent=1 // pred_region
      _
    $region37: #{phznet_forward.1} parent=1 // pred_fallthru
      _
    %207 = vsyncpa [#allocation3], 1
    %208 = vsyncpa [#allocation5], 1

</llo_original>
